<compile_context>
chip_gen: v7x
topology: tpu7x:2x2x1
jax: 0.10.0
libtpu: 0.0.40
codegen_flags: <defaults>
</compile_context>

<pallas_src>
import jax
import jax.numpy as jnp
import numpy as np
from jax import lax
from jax.experimental import pallas as pl
from jax.experimental.pallas import tpu as pltpu


def _cdiv(a, b):
    return -(-a // b)


def _round_up(x, m):
    return _cdiv(x, m) * m


def _pick_div_tile(padded, target, quantum):
    """Largest multiple of `quantum` that divides `padded` and is <= target."""
    cap = max(target // quantum, 1) * quantum
    t = min(cap, padded)
    while t > quantum and padded % t:
        t -= quantum
    return t


def _pick_balanced_tile(size, target, quantum):
    """Balanced tile (multiple of `quantum`) with minimal over-padding of `size`."""
    size_q = _round_up(size, quantum)
    n_tiles = _cdiv(size_q, max(target, quantum))
    t = _round_up(_cdiv(size_q, n_tiles), quantum)
    return t, _round_up(size_q, t)


def _vmem_capacity_bytes():
    try:
        info = pltpu.get_tpu_info()
        for attr in ("vmem_capacity_bytes", "vmem_bytes"):
            v = getattr(info, attr, None)
            if v:
                return int(v)
    except Exception:
        pass
    return 64 << 20  # conservative fallback (v7x per-TC budget)


def _flora_linear_kernel(x_ref, w_ref, b_ref, a_ref, p1t_ref, o_ref,
                         acc_ref, lr_ref):
    # x_ref  : (tm, tk)       input tile (compute dtype)
    # w_ref  : (tn, tk)       base weight tile in PyTorch (out, in) layout
    # b_ref  : (1, tn)  f32   bias tile
    # a_ref  : (tk, r1p)      folded low-rank "down" weight  (param_0 @ param_G)
    # p1t_ref: (r1p, tn) f32  folded low-rank "up" weight    (scale * param_1.T)
    # acc_ref: (tm, tn)  f32  base-matmul accumulator (VMEM scratch)
    # lr_ref : (tm, r1p) f32  low-rank intermediate (x @ A), carried across j
    j = pl.program_id(1)
    k = pl.program_id(2)

    @pl.when(k == 0)
    def _():
        acc_ref[...] = jnp.zeros_like(acc_ref)

    x = x_ref[...]
    # base matmul: contract x's last dim with W_base tile's last dim (== x @ W.T)
    acc_ref[...] += lax.dot_general(
        x, w_ref[...],
        dimension_numbers=(((1,), (1,)), ((), ())),
        preferred_element_type=jnp.float32)

    # Low-rank down-projection: computed once per (i, k) at j == 0 and carried
    # across the N (j) axis.  Requires the j grid axis to be "arbitrary".
    @pl.when(j == 0)
    def _():
        @pl.when(k == 0)
        def _():
            lr_ref[...] = jnp.zeros_like(lr_ref)
        lr_ref[...] += jnp.dot(x, a_ref[...],
                               preferred_element_type=jnp.float32)

    @pl.when(k == pl.num_programs(2) - 1)
    def _():
        flora = jnp.dot(lr_ref[...], p1t_ref[...],
                        preferred_element_type=jnp.float32)
        o_ref[...] = (acc_ref[...] + b_ref[...] + flora).astype(o_ref.dtype)


def flora_linear(x, w_base, b_base, param_0, param_g, param_1, scale,
                 *, tm=512, tn=512, tk=512, compute_dtype=None):
    """FLoRA Linear forward: x @ W_base.T + b_base + x @ W_flora.T.

    x: (..., in). w_base: (out, in). b_base: (out,).
    param_0: (in, r0). param_g: (r0, r1). param_1: (out, r1).
    compute_dtype: MXU input dtype (default: x.dtype); accumulation is f32.
    """
    out_dtype = x.dtype
    cdt = jnp.dtype(compute_dtype) if compute_dtype is not None else jnp.dtype(out_dtype)

    lead = x.shape[:-1]
    in_f = x.shape[-1]
    out_f = w_base.shape[0]
    r1 = param_g.shape[1]
    x2 = x.reshape(-1, in_f)
    M = x2.shape[0]

    # --- wrapper-side folds (tiny O(in*r0*r1) / O(out*r1) work) ---
    a_g = jnp.dot(param_0.astype(jnp.float32),
                  param_g.astype(jnp.float32)).astype(cdt)      # (in, r1)
    p1t = (param_1.astype(jnp.float32) * scale).T               # (r1, out), f32
    b2d = b_base.reshape(1, out_f).astype(jnp.float32)          # f32 bias
    x2 = x2.astype(cdt)
    w_c = w_base.astype(cdt)                                    # keep (out, in) layout

    # --- tiling: pad to hardware minima only; tiles divide padded extents ---
    sub = 8 * max(1, 4 // cdt.itemsize)          # sublane quantum: 8 f32, 16 bf16
    tm_e, M_p = _pick_balanced_tile(M, tm, sub)
    N_p = _round_up(out_f, 128)
    K_p = _round_up(in_f, 128)
    tn_e = _pick_div_tile(N_p, tn, 128)
    tk_e = _pick_div_tile(K_p, tk, 128)
    r1_p = _round_up(r1, 128)                    # lane-dense low-rank dim

    def pad2(a, rows, cols):
        pr, pc = rows - a.shape[0], cols - a.shape[1]
        return jnp.pad(a, ((0, pr), (0, pc))) if (pr or pc) else a

    x_p = pad2(x2, M_p, K_p)
    w_p = pad2(w_c, N_p, K_p)
    b_p = pad2(b2d, 1, N_p)
    a_p = pad2(a_g, K_p, r1_p)
    p1t_p = pad2(p1t, r1_p, N_p)

    grid = (M_p // tm_e, N_p // tn_e, K_p // tk_e)
    nk = grid[2]

    # A is only consumed at j == 0; for j > 0 freeze its block index at the last
    # K block so the (consecutive-equal-index) DMA is elided on those steps.
    def a_index_map(i, j, k):
        return (jnp.where(j == 0, k, nk - 1), 0)

    # --- cost / VMEM hints ---
    isz = cdt.itemsize
    osz = jnp.dtype(out_dtype).itemsize
    flops = 2 * M * (in_f * out_f + in_f * r1 + r1 * out_f)
    bytes_accessed = int(isz * (x_p.size + w_p.size + a_p.size)
                         + 4 * (b_p.size + p1t_p.size) + osz * M_p * N_p)
    vmem_est = (2 * isz * (tm_e * tk_e + tn_e * tk_e + tk_e * r1_p)   # x, W, A
                + 2 * 4 * (r1_p * tn_e + tn_e)                        # p1t, bias (f32)
                + 2 * osz * tm_e * tn_e                               # output tile
                + 4 * tm_e * (tn_e + r1_p))                           # f32 scratch
    vmem_cap = _vmem_capacity_bytes()
    vmem_limit = int(min(max(2 * vmem_est, 16 << 20),
                         max(24 << 20, vmem_cap - (24 << 20))))

    out_p = pl.pallas_call(
        _flora_linear_kernel,
        out_shape=jax.ShapeDtypeStruct((M_p, N_p), out_dtype),
        grid_spec=pltpu.PrefetchScalarGridSpec(
            num_scalar_prefetch=0,
            grid=grid,
            in_specs=[
                pl.BlockSpec((tm_e, tk_e), lambda i, j, k: (i, k)),    # x
                pl.BlockSpec((tn_e, tk_e), lambda i, j, k: (j, k)),    # W_base (out, in)
                pl.BlockSpec((1, tn_e), lambda i, j, k: (0, j)),       # bias (f32)
                pl.BlockSpec((tk_e, r1_p), a_index_map),               # A = P0 @ G
                pl.BlockSpec((r1_p, tn_e), lambda i, j, k: (0, j)),    # scale * P1.T (f32)
            ],
            out_specs=pl.BlockSpec((tm_e, tn_e), lambda i, j, k: (i, j)),
            scratch_shapes=[pltpu.VMEM((tm_e, tn_e), jnp.float32),
                            pltpu.VMEM((tm_e, r1_p), jnp.float32)],
        ),
        compiler_params=pltpu.CompilerParams(
            # j MUST be "arbitrary": the low-rank accumulator is carried across it.
            dimension_semantics=("parallel", "arbitrary", "arbitrary"),
            vmem_limit_bytes=vmem_limit),
        cost_estimate=pl.CostEstimate(
            flops=flops, transcendentals=0, bytes_accessed=bytes_accessed),
    )(x_p, w_p, b_p, a_p, p1t_p)

    return out_p[:M, :out_f].reshape(lead + (out_f,))


def flora_linear_ref(x, w_base, b_base, param_0, param_g, param_1, scale):
    # Pure-JAX reference following the PyTorch module literally.
    dt = jnp.tensordot(param_g, param_0, axes=[[0], [1]])    # (r1, in)
    dt = jnp.tensordot(dt, param_1, axes=[[0], [1]])         # (in, out)
    w_flora = scale * dt.T                                   # (out, in)
    base_out = x @ w_base.T + b_base
    flora_out = x @ w_flora.T
    return base_out + flora_out


if __name__ == "__main__":
    key = jax.random.PRNGKey(0)

    def make_case(k, M, in_f, out_f, r0, r1, scale, dtype=jnp.float32):
        ks = jax.random.split(k, 6)
        x = jax.random.normal(ks[0], (M, in_f), dtype=dtype)
        w_base = jax.random.normal(ks[1], (out_f, in_f), dtype=dtype) * 0.05
        b_base = jax.random.normal(ks[2], (out_f,), dtype=dtype) * 0.05
        # NOTE: init_parameters() zeros param_G; random values here so the
        # low-rank path is actually exercised (forward formula unchanged).
        p0 = jax.random.normal(ks[3], (in_f, r0), dtype=dtype) * 0.1
        pg = jax.random.normal(ks[4], (r0, r1), dtype=dtype) * 0.1
        p1 = jax.random.normal(ks[5], (out_f, r1), dtype=dtype) * 0.1
        return x, w_base, b_base, p0, pg, p1, scale

    flora_fn = jax.jit(flora_linear,
                       static_argnames=("tm", "tn", "tk", "compute_dtype"))

    k1, k2, k3 = jax.random.split(key, 3)

    # Small, module-consistent shapes: batch=8, in=32, out=64, N=2, r=[8, 8].
    case1 = make_case(k1, 8, 32, 64, 8, 8, 1.0)
    out1 = jax.block_until_ready(flora_fn(*case1))
    ref1 = flora_linear_ref(*case1)
    np.testing.assert_allclose(np.asarray(out1), np.asarray(ref1),
                               rtol=1e-5, atol=1e-5)

    # Awkward shapes exercising divisor tiling, the K reduction and the
    # low-rank dedup / carry across 5 N tiles (M=300 -> tm=304, N=K=640 -> 128).
    case2 = make_case(k2, 300, 640, 640, 8, 8, 0.5)
    out2 = jax.block_until_ready(flora_fn(*case2))
    ref2 = flora_linear_ref(*case2)
    np.testing.assert_allclose(np.asarray(out2), np.asarray(ref2),
                               rtol=2e-2, atol=2e-2)

    # bf16 compute-dtype path (f32 accumulation, f32 bias/up-proj, f32 output).
    case3 = make_case(k3, 128, 256, 256, 8, 8, 1.0)
    out3 = jax.block_until_ready(flora_fn(*case3, compute_dtype=jnp.bfloat16))
    ref3 = flora_linear_ref(*case3)
    np.testing.assert_allclose(np.asarray(out3), np.asarray(ref3),
                               rtol=2e-2, atol=2e-2)

    print("KERNEL_OK")
</pallas_src>

<mosaic_0001>
module attributes {stable_mosaic.version = 11 : i64} {
  func.func @_flora_linear_kernel(%arg0: i32, %arg1: i32, %arg2: i32, %arg3: memref<8x128xf32, #tpu.memory_space<vmem>>, %arg4: memref<128x128xf32, #tpu.memory_space<vmem>>, %arg5: memref<1x128xf32, #tpu.memory_space<vmem>>, %arg6: memref<128x128xf32, #tpu.memory_space<vmem>>, %arg7: memref<128x128xf32, #tpu.memory_space<vmem>>, %arg8: memref<8x128xf32, #tpu.memory_space<vmem>>, %arg9: memref<8x128xf32, #tpu.memory_space<vmem>>, %arg10: memref<8x128xf32, #tpu.memory_space<vmem>>) attributes {dimension_semantics = [#tpu.dimension_semantics<parallel>, #tpu.dimension_semantics<arbitrary>, #tpu.dimension_semantics<arbitrary>], iteration_bounds = array<i64: 1, 1, 1>, scalar_prefetch = 0 : i64, scratch_operands = 2 : i64, tpu.core_type = #tpu.core_type<tc>, window_params = [{transform_indices = @transform_0, window_bounds = array<i64: 8, 128>}, {transform_indices = @transform_1, window_bounds = array<i64: 128, 128>}, {transform_indices = @transform_2, window_bounds = array<i64: 1, 128>}, {transform_indices = @transform_3, window_bounds = array<i64: 128, 128>}, {transform_indices = @transform_4, window_bounds = array<i64: 128, 128>}, {transform_indices = @transform_5, window_bounds = array<i64: 8, 128>}]} {
    %c0_i32 = arith.constant 0 : i32
    %0 = arith.cmpi eq, %arg2, %c0_i32 : i32
    %1 = arith.extui %0 : i1 to i32
    %c0_i32_0 = arith.constant 0 : i32
    %2 = arith.cmpi ne, %1, %c0_i32_0 : i32
    scf.if %2 {
      %cst_12 = arith.constant 0.000000e+00 : f32
      %15 = vector.broadcast %cst_12 : f32 to vector<8x128xf32>
      %c0_13 = arith.constant 0 : index
      %c0_14 = arith.constant 0 : index
      %16 = vector.load %arg9[%c0_13, %c0_14] : memref<8x128xf32, #tpu.memory_space<vmem>>, vector<8x128xf32>
      tpu.vector_store %arg9[%c0_13, %c0_14], %15 {strides = array<i32>} : memref<8x128xf32, #tpu.memory_space<vmem>>, vector<8x128xf32>,
    } else {
    }
    %c0 = arith.constant 0 : index
    %c0_1 = arith.constant 0 : index
    %3 = vector.load %arg3[%c0, %c0_1] : memref<8x128xf32, #tpu.memory_space<vmem>>, vector<8x128xf32>
    %c0_2 = arith.constant 0 : index
    %c0_3 = arith.constant 0 : index
    %4 = vector.load %arg9[%c0_2, %c0_3] : memref<8x128xf32, #tpu.memory_space<vmem>>, vector<8x128xf32>
    %c0_4 = arith.constant 0 : index
    %c0_5 = arith.constant 0 : index
    %5 = vector.load %arg4[%c0_4, %c0_5] : memref<128x128xf32, #tpu.memory_space<vmem>>, vector<128x128xf32>
    %cst = arith.constant dense<0.000000e+00> : vector<8x128xf32>
    %6 = tpu.matmul %3, %5, %cst {dimension_numbers = #tpu.dot_dimension_numbers<[1], [1], [0], [0], [0, 0, 1, 0], [], []>} : vector<8x128xf32>, vector<128x128xf32>, vector<8x128xf32> -> vector<8x128xf32>
    %7 = arith.addf %4, %6 : vector<8x128xf32>
    %c0_6 = arith.constant 0 : index
    %c0_7 = arith.constant 0 : index
    %8 = vector.load %arg9[%c0_6, %c0_7] : memref<8x128xf32, #tpu.memory_space<vmem>>, vector<8x128xf32>
    tpu.vector_store %arg9[%c0_6, %c0_7], %7 {strides = array<i32>} : memref<8x128xf32, #tpu.memory_space<vmem>>, vector<8x128xf32>,
    %c0_i32_8 = arith.constant 0 : i32
    %9 = arith.cmpi eq, %arg1, %c0_i32_8 : i32
    %10 = arith.extui %9 : i1 to i32
    %c0_i32_9 = arith.constant 0 : i32
    %11 = arith.cmpi ne, %10, %c0_i32_9 : i32
    scf.if %11 {
      %c0_i32_12 = arith.constant 0 : i32
      %15 = arith.cmpi eq, %arg2, %c0_i32_12 : i32
      %16 = arith.extui %15 : i1 to i32
      %c0_i32_13 = arith.constant 0 : i32
      %17 = arith.cmpi ne, %16, %c0_i32_13 : i32
      scf.if %17 {
        %cst_21 = arith.constant 0.000000e+00 : f32
        %23 = vector.broadcast %cst_21 : f32 to vector<8x128xf32>
        %c0_22 = arith.constant 0 : index
        %c0_23 = arith.constant 0 : index
        %24 = vector.load %arg10[%c0_22, %c0_23] : memref<8x128xf32, #tpu.memory_space<vmem>>, vector<8x128xf32>
        tpu.vector_store %arg10[%c0_22, %c0_23], %23 {strides = array<i32>} : memref<8x128xf32, #tpu.memory_space<vmem>>, vector<8x128xf32>,
      } else {
      }
      %c0_14 = arith.constant 0 : index
      %c0_15 = arith.constant 0 : index
      %18 = vector.load %arg10[%c0_14, %c0_15] : memref<8x128xf32, #tpu.memory_space<vmem>>, vector<8x128xf32>
      %c0_16 = arith.constant 0 : index
      %c0_17 = arith.constant 0 : index
      %19 = vector.load %arg6[%c0_16, %c0_17] : memref<128x128xf32, #tpu.memory_space<vmem>>, vector<128x128xf32>
      %cst_18 = arith.constant dense<0.000000e+00> : vector<8x128xf32>
      %20 = tpu.matmul %3, %19, %cst_18 {dimension_numbers = #tpu.dot_dimension_numbers<[1], [0], [0], [1], [0, 0, 1, 1], [], []>} : vector<8x128xf32>, vector<128x128xf32>, vector<8x128xf32> -> vector<8x128xf32>
      %21 = arith.addf %18, %20 : vector<8x128xf32>
      %c0_19 = arith.constant 0 : index
      %c0_20 = arith.constant 0 : index
      %22 = vector.load %arg10[%c0_19, %c0_20] : memref<8x128xf32, #tpu.memory_space<vmem>>, vector<8x128xf32>
      tpu.vector_store %arg10[%c0_19, %c0_20], %21 {strides = array<i32>} : memref<8x128xf32, #tpu.memory_space<vmem>>, vector<8x128xf32>,
    } else {
    }
    %c0_i32_10 = arith.constant 0 : i32
    %12 = arith.cmpi eq, %arg2, %c0_i32_10 : i32
    %13 = arith.extui %12 : i1 to i32
    %c0_i32_11 = arith.constant 0 : i32
    %14 = arith.cmpi ne, %13, %c0_i32_11 : i32
    scf.if %14 {
      %c0_12 = arith.constant 0 : index
      %c0_13 = arith.constant 0 : index
      %15 = vector.load %arg10[%c0_12, %c0_13] : memref<8x128xf32, #tpu.memory_space<vmem>>, vector<8x128xf32>
      %c0_14 = arith.constant 0 : index
      %c0_15 = arith.constant 0 : index
      %16 = vector.load %arg7[%c0_14, %c0_15] : memref<128x128xf32, #tpu.memory_space<vmem>>, vector<128x128xf32>
      %cst_16 = arith.constant dense<0.000000e+00> : vector<8x128xf32>
      %17 = tpu.matmul %15, %16, %cst_16 {dimension_numbers = #tpu.dot_dimension_numbers<[1], [0], [0], [1], [0, 0, 1, 1], [], []>} : vector<8x128xf32>, vector<128x128xf32>, vector<8x128xf32> -> vector<8x128xf32>
      %c0_17 = arith.constant 0 : index
      %c0_18 = arith.constant 0 : index
      %18 = vector.load %arg9[%c0_17, %c0_18] : memref<8x128xf32, #tpu.memory_space<vmem>>, vector<8x128xf32>
      %c0_19 = arith.constant 0 : index
      %c0_20 = arith.constant 0 : index
      %19 = vector.load %arg5[%c0_19, %c0_20] : memref<1x128xf32, #tpu.memory_space<vmem>>, vector<1x128xf32>
      %20 = vector.broadcast %19 : vector<1x128xf32> to vector<8x128xf32>
      %21 = arith.addf %18, %20 : vector<8x128xf32>
      %22 = arith.addf %21, %17 : vector<8x128xf32>
      %c0_21 = arith.constant 0 : index
      %c0_22 = arith.constant 0 : index
      %23 = vector.load %arg8[%c0_21, %c0_22] : memref<8x128xf32, #tpu.memory_space<vmem>>, vector<8x128xf32>
      tpu.vector_store %arg8[%c0_21, %c0_22], %22 {strides = array<i32>} : memref<8x128xf32, #tpu.memory_space<vmem>>, vector<8x128xf32>,
    } else {
    }
    return
  }
  func.func @transform_0(%arg0: i32, %arg1: i32, %arg2: i32) -> (i32, i32) {
    %c0_i32 = arith.constant 0 : i32
    return %arg0, %arg2 : i32, i32
  }
  func.func @transform_1(%arg0: i32, %arg1: i32, %arg2: i32) -> (i32, i32) {
    %c0_i32 = arith.constant 0 : i32
    return %arg1, %arg2 : i32, i32
  }
  func.func @transform_2(%arg0: i32, %arg1: i32, %arg2: i32) -> (i32, i32) {
    %c0_i32 = arith.constant 0 : i32
    %c0_i32_0 = arith.constant 0 : i32
    return %c0_i32, %arg1 : i32, i32
  }
  func.func @transform_3(%arg0: i32, %arg1: i32, %arg2: i32) -> (i32, i32) {
    %c0_i32 = arith.constant 0 : i32
    %0 = arith.cmpi eq, %arg1, %c0_i32 : i32
    %c0_i32_0 = arith.constant 0 : i32
    %1 = arith.select %0, %arg2, %c0_i32_0 : i32
    %c0_i32_1 = arith.constant 0 : i32
    %c0_i32_2 = arith.constant 0 : i32
    return %1, %c0_i32_1 : i32, i32
  }
  func.func @transform_4(%arg0: i32, %arg1: i32, %arg2: i32) -> (i32, i32) {
    %c0_i32 = arith.constant 0 : i32
    %c0_i32_0 = arith.constant 0 : i32
    return %c0_i32, %arg1 : i32, i32
  }
  func.func @transform_5(%arg0: i32, %arg1: i32, %arg2: i32) -> (i32, i32) {
    %c0_i32 = arith.constant 0 : i32
    return %arg0, %arg1 : i32, i32
  }
}

</mosaic_0001>

<llo_original>
// kernel: flora_linear.1
$region0: #{flora_linear.1}
  #allocation0 [shape = 'u32[]', space=smem, size = 0x4, offset = 0x4, fixed_abs, tag = 'smem constant byte address 0x4 - core index']
  #allocation1 [shape = 'u32[144,128]{1,0:T(1,128)}', space=vmem, size = 0x12000, scoped, tag = 'internal scratch']
  #allocation2 [shape = 'f32[8,128]{1,0:T(8,128)}', space=vmem, size = 0x1000, scoped, tag = 'scratch operand']
  #allocation3 [shape = 'f32[8,128]{1,0:T(8,128)}', space=vmem, size = 0x1000, scoped, tag = 'scratch operand']
  %s0 = inlined_call_operand.vmem [shape: f32[8,128], index: 0, kind: input, shape index: {}]
  %s1 = inlined_call_operand.vmem [shape: f32[128,128], index: 1, kind: input, shape index: {}]
  %s2 = inlined_call_operand.vmem [shape: f32[1,128], index: 2, kind: input, shape index: {}]
  %s3 = inlined_call_operand.vmem [shape: f32[128,128], index: 3, kind: input, shape index: {}]
  %s4 = inlined_call_operand.vmem [shape: f32[128,128], index: 4, kind: input, shape index: {}]
  %s5 = inlined_call_operand.hbm [shape: f32[8,128], index: 5, kind: output, shape index: {}]
  %s6 = sld [smem:[#allocation0]]
  $region46: #{flora_linear.1} parent=0
    _
  %s8 = ssub.s32 1, %s6
  %s9 = scalar_select 0, %s8, %s6
  $region1: #{flora_linear.1} parent=0
    #allocation4 [shape = 'u8[4096]{0}', space=vmem, size = 0x1000, scoped, tag = 'output window, operand 0, single buffered']
    #allocation5 [shape = 's32[1]{0}', space=sflag, size = 0x4, scoped, tag = 'scoped memory for flora_linear.1']
    %10 = vsyncpa [#allocation5], 0
    // Predicated region
    $region2: #{flora_linear.1} parent=1 // pred_check
      _
    $region3: #{flora_linear.1} parent=1 // pred_check_branch
      %12 = sbr.rel (0) target = $region5
    $region4: #{flora_linear.1} parent=1 // pred_region
      _
    $region5: #{flora_linear.1} parent=1 // pred_fallthru
      _
    // Predicated region
    $region6: #{flora_linear.1} parent=1 // pred_check
      _
    $region7: #{flora_linear.1} parent=1 // pred_check_branch
      %14 = sbr.rel (0) target = $region9
    $region8: #{flora_linear.1} parent=1 // pred_region
      _
    $region9: #{flora_linear.1} parent=1 // pred_fallthru
      _
    // Predicated region
    $region10: #{flora_linear.1} parent=1 // pred_check
      _
    $region11: #{flora_linear.1} parent=1 // pred_check_branch
      %16 = sbr.rel (0) target = $region13
    $region12: #{flora_linear.1} parent=1 // pred_region
      _
    $region13: #{flora_linear.1} parent=1 // pred_fallthru
      _
    // Predicated region
    $region14: #{flora_linear.1} parent=1 // pred_check
      _
    $region15: #{flora_linear.1} parent=1 // pred_check_branch
      %18 = sbr.rel (0) target = $region17
    $region16: #{flora_linear.1} parent=1 // pred_region
      %p19 = scmp.eq.s32.totalorder 0, 0
      %s20 = scalar_select %p19, 0, 0
      %s21 = smul.u32 16, %s20
      %p22 = scmp.lt.s32.totalorder %s21, 15
      %s23 = scalar_select %p22, %s21, 15
      %s24 = smul.addr %s23, 8
      %s25 = scalar_lea.vmem %s3, %s24
      %p26 = scmp.eq.s32.totalorder 0, 0
      %s27 = scalar_select %p26, 0, 0
      %s28 = smul.u32 16, %s27
    $region17: #{flora_linear.1} parent=1 // pred_fallthru
      _
    // Predicated region
    $region18: #{flora_linear.1} parent=1 // pred_check
      _
    $region19: #{flora_linear.1} parent=1 // pred_check_branch
      %30 = sbr.rel (0) target = $region21
    $region20: #{flora_linear.1} parent=1 // pred_region
      _
    $region21: #{flora_linear.1} parent=1 // pred_fallthru
      _
    %p31 = scmp.eq.s32.totalorder 0, 0
    %s32 = scalar_select %p31, 0, 0
    %s33 = smul.u32 16, %s32
    %p34 = scmp.lt.s32.totalorder %s33, 15
    %s35 = scalar_select %p34, %s33, 15
    %s36 = smul.addr %s35, 8
    %s37 = scalar_lea.vmem %s3, %s36
    %p38 = scmp.eq.s32.totalorder 0, 0
    %s39 = scalar_select %p38, 0, 0
    %s40 = smul.u32 16, %s39
    %p41 = scmp.lt.s32.totalorder %s40, 15
    %s42 = scalar_select %p41, %s40, 15
    %s43 = smul.addr %s42, 8
    %s44 = scalar_lea.vmem %s3, %s43
    %p45 = scmp.eq.s32.totalorder 0, 0
    %s46 = scalar_select %p45, 0, 0
    %s47 = smul.u32 16, %s46
    %p48 = scmp.eq.s32.totalorder 0, 0
    // Predicated region
    $region22: #{flora_linear.1} parent=1 // pred_check
      %p49 = pneg %p48
    $region23: #{flora_linear.1} parent=1 // pred_check_branch
      %51 = sbr.rel (%p49) target = $region25
    $region24: #{flora_linear.1} parent=1 // pred_region
      %52 = vst [vmem:[#allocation2] sm:$0xff] 0.0
    $region25: #{flora_linear.1} parent=1 // pred_fallthru
      _
    %v53 = vld [vmem:[%s0] sm:$0xff]
    %v54 = vld [vmem:[#allocation2] sm:$0xff]
    %v55 = vld [vmem:[%s1] sm:$0xff]
    %v56 = vld [vmem:[%s1 + $0x8] sm:$0xff]
    %v57 = vld [vmem:[%s1 + $0x10] sm:$0xff]
    %v58 = vld [vmem:[%s1 + $0x18] sm:$0xff]
    %v59 = vld [vmem:[%s1 + $0x20] sm:$0xff]
    %v60 = vld [vmem:[%s1 + $0x28] sm:$0xff]
    %v61 = vld [vmem:[%s1 + $0x30] sm:$0xff]
    %v62 = vld [vmem:[%s1 + $0x38] sm:$0xff]
    %v63 = vld [vmem:[%s1 + $0x40] sm:$0xff]
    %v64 = vld [vmem:[%s1 + $0x48] sm:$0xff]
    %v65 = vld [vmem:[%s1 + $0x50] sm:$0xff]
    %v66 = vld [vmem:[%s1 + $0x58] sm:$0xff]
    %v67 = vld [vmem:[%s1 + $0x60] sm:$0xff]
    %v68 = vld [vmem:[%s1 + $0x68] sm:$0xff]
    %v69 = vld [vmem:[%s1 + $0x70] sm:$0xff]
    %v70 = vld [vmem:[%s1 + $0x78] sm:$0xff]
    %71 = vmatprep.subr.mxu0 0.0
    %72 = vmatpush1.xpose.msra.mxu0 %v55
    %73 = vmatprep.subr.mxu0 0.0
    %74 = vmatpush1.xpose.msra.mxu0 %v56
    %75 = vmatprep.subr.mxu0 0.0
    %76 = vmatpush1.xpose.msra.mxu0 %v57
    %77 = vmatprep.subr.mxu0 0.0
    %78 = vmatpush1.xpose.msra.mxu0 %v58
    %79 = vmatprep.subr.mxu0 0.0
    %80 = vmatpush1.xpose.msra.mxu0 %v59
    %81 = vmatprep.subr.mxu0 0.0
    %82 = vmatpush1.xpose.msra.mxu0 %v60
    %83 = vmatprep.subr.mxu0 0.0
    %84 = vmatpush1.xpose.msra.mxu0 %v61
    %85 = vmatprep.subr.mxu0 0.0
    %86 = vmatpush1.xpose.msra.mxu0 %v62
    %87 = vmatprep.subr.mxu0 0.0
    %88 = vmatpush1.xpose.msra.mxu0 %v63
    %89 = vmatprep.subr.mxu0 0.0
    %90 = vmatpush1.xpose.msra.mxu0 %v64
    %91 = vmatprep.subr.mxu0 0.0
    %92 = vmatpush1.xpose.msra.mxu0 %v65
    %93 = vmatprep.subr.mxu0 0.0
    %94 = vmatpush1.xpose.msra.mxu0 %v66
    %95 = vmatprep.subr.mxu0 0.0
    %96 = vmatpush1.xpose.msra.mxu0 %v67
    %97 = vmatprep.subr.mxu0 0.0
    %98 = vmatpush1.xpose.msra.mxu0 %v68
    %99 = vmatprep.subr.mxu0 0.0
    %100 = vmatpush1.xpose.msra.mxu0 %v69
    %101 = vmatprep.subr.mxu0 0.0
    %102 = vmatpush1.xpose.msra.mxu0 %v70
    %103 = vmatprep.subr.mxu0 0.0
    %104 = vmatpush1.xpose.msra.mxu0 0.0
    %105 = vmatprep.subr.mxu0 0.0
    %106 = vmatpush1.xpose.msra.mxu0 0.0
    %107 = vmatprep.subr.mxu0 0.0
    %108 = vmatpush1.xpose.msra.mxu0 0.0
    %109 = vmatprep.subr.mxu0 0.0
    %110 = vmatpush1.xpose.msra.mxu0 0.0
    %111 = vmatprep.subr.mxu0 0.0
    %112 = vmatpush1.xpose.msra.mxu0 0.0
    %113 = vmatprep.subr.mxu0 0.0
    %114 = vmatpush1.xpose.msra.mxu0 0.0
    %115 = vmatprep.subr.mxu0 0.0
    %116 = vmatpush1.xpose.msra.mxu0 0.0
    %117 = vmatprep.subr.mxu0 0.0
    %118 = vmatpush1.xpose.msra.mxu0 0.0
    %119 = vmatprep.subr.mxu0 0.0
    %120 = vmatpush1.xpose.msra.mxu0 0.0
    %121 = vmatprep.subr.mxu0 0.0
    %122 = vmatpush1.xpose.msra.mxu0 0.0
    %123 = vmatprep.subr.mxu0 0.0
    %124 = vmatpush1.xpose.msra.mxu0 0.0
    %125 = vmatprep.subr.mxu0 0.0
    %126 = vmatpush1.xpose.msra.mxu0 0.0
    %127 = vmatprep.subr.mxu0 0.0
    %128 = vmatpush1.xpose.msra.mxu0 0.0
    %129 = vmatprep.subr.mxu0 0.0
    %130 = vmatpush1.xpose.msra.mxu0 0.0
    %131 = vmatprep.subr.mxu0 0.0
    %132 = vmatpush1.xpose.msra.mxu0 0.0
    %133 = vmatprep.subr.mxu0 0.0
    %134 = vmatpush1.xpose.msra.mxu0 0.0
    %135 = vmatprep.mubr.f32.mxu0 0.0
    %136 = vmatmul.mubr.f32.gmra.mrb[0].mxu0 %v53
    %v137 = vpop.f32.mrb[0].mxu0
    %v138 = vadd.f32 0.0, %v137
    %v139 = vpop.f32.mrb[0].mxu0
    %140 = vdwg.mxu0
    %v141 = vadd.f32 %v54, %v138
    %142 = vst [vmem:[#allocation2] sm:$0xff] %v141
    %p143 = scmp.eq.s32.totalorder 0, 0
    // Predicated region
    $region26: #{flora_linear.1} parent=1 // pred_check
      %p144 = pneg %p143
    $region27: #{flora_linear.1} parent=1 // pred_check_branch
      %146 = sbr.rel (%p144) target = $region29
    $region28: #{flora_linear.1} parent=1 // pred_region
      // Predicated region
      $region30: #{flora_linear.1} parent=28 // pred_check
        %p147 = pneg %p48
      $region31: #{flora_linear.1} parent=28 // pred_check_branch
        %149 = sbr.rel (%p147) target = $region33
      $region32: #{flora_linear.1} parent=28 // pred_region
        %150 = vst [vmem:[#allocation3] sm:$0xff] 0.0
      $region33: #{flora_linear.1} parent=28 // pred_fallthru
        _
      %v151 = vld [vmem:[#allocation3] sm:$0xff]
      %v152 = vld [vmem:[%s44] sm:$0xff]
      %v153 = vld [vmem:[%s44 + $0x8] sm:$0xff]
      %v154 = vld [vmem:[%s44 + $0x10] sm:$0xff]
      %v155 = vld [vmem:[%s44 + $0x18] sm:$0xff]
      %v156 = vld [vmem:[%s44 + $0x20] sm:$0xff]
      %v157 = vld [vmem:[%s44 + $0x28] sm:$0xff]
      %v158 = vld [vmem:[%s44 + $0x30] sm:$0xff]
      %v159 = vld [vmem:[%s44 + $0x38] sm:$0xff]
      %v160 = vld [vmem:[%s44 + $0x40] sm:$0xff]
      %v161 = vld [vmem:[%s44 + $0x48] sm:$0xff]
      %v162 = vld [vmem:[%s44 + $0x50] sm:$0xff]
      %v163 = vld [vmem:[%s44 + $0x58] sm:$0xff]
      %v164 = vld [vmem:[%s44 + $0x60] sm:$0xff]
      %v165 = vld [vmem:[%s44 + $0x68] sm:$0xff]
      %v166 = vld [vmem:[%s44 + $0x70] sm:$0xff]
      %v167 = vld [vmem:[%s44 + $0x78] sm:$0xff]
      %168 = vmatprep.subr.mxu0 0.0
      %169 = vmatpush1.msra.mxu0 %v152
      %170 = vmatprep.subr.mxu0 0.0
      %171 = vmatpush1.msra.mxu0 %v153
      %172 = vmatprep.subr.mxu0 0.0
      %173 = vmatpush1.msra.mxu0 %v154
      %174 = vmatprep.subr.mxu0 0.0
      %175 = vmatpush1.msra.mxu0 %v155
      %176 = vmatprep.subr.mxu0 0.0
      %177 = vmatpush1.msra.mxu0 %v156
      %178 = vmatprep.subr.mxu0 0.0
      %179 = vmatpush1.msra.mxu0 %v157
      %180 = vmatprep.subr.mxu0 0.0
      %181 = vmatpush1.msra.mxu0 %v158
      %182 = vmatprep.subr.mxu0 0.0
      %183 = vmatpush1.msra.mxu0 %v159
      %184 = vmatprep.subr.mxu0 0.0
      %185 = vmatpush1.msra.mxu0 %v160
      %186 = vmatprep.subr.mxu0 0.0
      %187 = vmatpush1.msra.mxu0 %v161
      %188 = vmatprep.subr.mxu0 0.0
      %189 = vmatpush1.msra.mxu0 %v162
      %190 = vmatprep.subr.mxu0 0.0
      %191 = vmatpush1.msra.mxu0 %v163
      %192 = vmatprep.subr.mxu0 0.0
      %193 = vmatpush1.msra.mxu0 %v164
      %194 = vmatprep.subr.mxu0 0.0
      %195 = vmatpush1.msra.mxu0 %v165
      %196 = vmatprep.subr.mxu0 0.0
      %197 = vmatpush1.msra.mxu0 %v166
      %198 = vmatprep.subr.mxu0 0.0
      %199 = vmatpush1.msra.mxu0 %v167
      %200 = vmatprep.subr.mxu0 0.0
      %201 = vmatpush1.msra.mxu0 0.0
      %202 = vmatprep.subr.mxu0 0.0
      %203 = vmatpush1.msra.mxu0 0.0
      %204 = vmatprep.subr.mxu0 0.0
      %205 = vmatpush1.msra.mxu0 0.0
      %206 = vmatprep.subr.mxu0 0.0
      %207 = vmatpush1.msra.mxu0 0.0
      %208 = vmatprep.subr.mxu0 0.0
      %209 = vmatpush1.msra.mxu0 0.0
      %210 = vmatprep.subr.mxu0 0.0
      %211 = vmatpush1.msra.mxu0 0.0
      %212 = vmatprep.subr.mxu0 0.0
      %213 = vmatpush1.msra.mxu0 0.0
      %214 = vmatprep.subr.mxu0 0.0
      %215 = vmatpush1.msra.mxu0 0.0
      %216 = vmatprep.subr.mxu0 0.0
      %217 = vmatpush1.msra.mxu0 0.0
      %218 = vmatprep.subr.mxu0 0.0
      %219 = vmatpush1.msra.mxu0 0.0
      %220 = vmatprep.subr.mxu0 0.0
      %221 = vmatpush1.msra.mxu0 0.0
      %222 = vmatprep.subr.mxu0 0.0
      %223 = vmatpush1.msra.mxu0 0.0
      %224 = vmatprep.subr.mxu0 0.0
      %225 = vmatpush1.msra.mxu0 0.0
      %226 = vmatprep.subr.mxu0 0.0
      %227 = vmatpush1.msra.mxu0 0.0
      %228 = vmatprep.subr.mxu0 0.0
      %229 = vmatpush1.msra.mxu0 0.0
      %230 = vmatprep.subr.mxu0 0.0
      %231 = vmatpush1.msra.mxu0 0.0
      %232 = vmatprep.mubr.f32.mxu0 0.0
      %233 = vmatmul.mubr.f32.gmra.mrb[0].mxu0 %v53
      %v234 = vpop.f32.mrb[0].mxu0
      %v235 = vadd.f32 0.0, %v234
      %v236 = vpop.f32.mrb[0].mxu0
      %237 = vdwg.mxu0
      %v238 = vadd.f32 %v151, %v235
      %239 = vst [vmem:[#allocation3] sm:$0xff] %v238
    $region29: #{flora_linear.1} parent=1 // pred_fallthru
      _
    // Predicated region
    $region34: #{flora_linear.1} parent=1 // pred_check
      %p240 = pneg %p48
    $region35: #{flora_linear.1} parent=1 // pred_check_branch
      %242 = sbr.rel (%p240) target = $region37
    $region36: #{flora_linear.1} parent=1 // pred_region
      %v243 = vld [vmem:[#allocation3] sm:$0xff]
      %v244 = vld [vmem:[%s4] sm:$0xff]
      %v245 = vld [vmem:[%s4 + $0x8] sm:$0xff]
      %v246 = vld [vmem:[%s4 + $0x10] sm:$0xff]
      %v247 = vld [vmem:[%s4 + $0x18] sm:$0xff]
      %v248 = vld [vmem:[%s4 + $0x20] sm:$0xff]
      %v249 = vld [vmem:[%s4 + $0x28] sm:$0xff]
      %v250 = vld [vmem:[%s4 + $0x30] sm:$0xff]
      %v251 = vld [vmem:[%s4 + $0x38] sm:$0xff]
      %v252 = vld [vmem:[%s4 + $0x40] sm:$0xff]
      %v253 = vld [vmem:[%s4 + $0x48] sm:$0xff]
      %v254 = vld [vmem:[%s4 + $0x50] sm:$0xff]
      %v255 = vld [vmem:[%s4 + $0x58] sm:$0xff]
      %v256 = vld [vmem:[%s4 + $0x60] sm:$0xff]
      %v257 = vld [vmem:[%s4 + $0x68] sm:$0xff]
      %v258 = vld [vmem:[%s4 + $0x70] sm:$0xff]
      %v259 = vld [vmem:[%s4 + $0x78] sm:$0xff]
      %260 = vmatprep.subr.mxu0 0.0
      %261 = vmatpush1.msra.mxu0 %v244
      %262 = vmatprep.subr.mxu0 0.0
      %263 = vmatpush1.msra.mxu0 %v245
      %264 = vmatprep.subr.mxu0 0.0
      %265 = vmatpush1.msra.mxu0 %v246
      %266 = vmatprep.subr.mxu0 0.0
      %267 = vmatpush1.msra.mxu0 %v247
      %268 = vmatprep.subr.mxu0 0.0
      %269 = vmatpush1.msra.mxu0 %v248
      %270 = vmatprep.subr.mxu0 0.0
      %271 = vmatpush1.msra.mxu0 %v249
      %272 = vmatprep.subr.mxu0 0.0
      %273 = vmatpush1.msra.mxu0 %v250
      %274 = vmatprep.subr.mxu0 0.0
      %275 = vmatpush1.msra.mxu0 %v251
      %276 = vmatprep.subr.mxu0 0.0
      %277 = vmatpush1.msra.mxu0 %v252
      %278 = vmatprep.subr.mxu0 0.0
      %279 = vmatpush1.msra.mxu0 %v253
      %280 = vmatprep.subr.mxu0 0.0
      %281 = vmatpush1.msra.mxu0 %v254
      %282 = vmatprep.subr.mxu0 0.0
      %283 = vmatpush1.msra.mxu0 %v255
      %284 = vmatprep.subr.mxu0 0.0
      %285 = vmatpush1.msra.mxu0 %v256
      %286 = vmatprep.subr.mxu0 0.0
      %287 = vmatpush1.msra.mxu0 %v257
      %288 = vmatprep.subr.mxu0 0.0
      %289 = vmatpush1.msra.mxu0 %v258
      %290 = vmatprep.subr.mxu0 0.0
      %291 = vmatpush1.msra.mxu0 %v259
      %292 = vmatprep.subr.mxu0 0.0
      %293 = vmatpush1.msra.mxu0 0.0
      %294 = vmatprep.subr.mxu0 0.0
      %295 = vmatpush1.msra.mxu0 0.0
      %296 = vmatprep.subr.mxu0 0.0
      %297 = vmatpush1.msra.mxu0 0.0
      %298 = vmatprep.subr.mxu0 0.0
      %299 = vmatpush1.msra.mxu0 0.0
      %300 = vmatprep.subr.mxu0 0.0
      %301 = vmatpush1.msra.mxu0 0.0
      %302 = vmatprep.subr.mxu0 0.0
      %303 = vmatpush1.msra.mxu0 0.0
      %304 = vmatprep.subr.mxu0 0.0
      %305 = vmatpush1.msra.mxu0 0.0
      %306 = vmatprep.subr.mxu0 0.0
      %307 = vmatpush1.msra.mxu0 0.0
      %308 = vmatprep.subr.mxu0 0.0
      %309 = vmatpush1.msra.mxu0 0.0
      %310 = vmatprep.subr.mxu0 0.0
      %311 = vmatpush1.msra.mxu0 0.0
      %312 = vmatprep.subr.mxu0 0.0
      %313 = vmatpush1.msra.mxu0 0.0
      %314 = vmatprep.subr.mxu0 0.0
      %315 = vmatpush1.msra.mxu0 0.0
      %316 = vmatprep.subr.mxu0 0.0
      %317 = vmatpush1.msra.mxu0 0.0
      %318 = vmatprep.subr.mxu0 0.0
      %319 = vmatpush1.msra.mxu0 0.0
      %320 = vmatprep.subr.mxu0 0.0
      %321 = vmatpush1.msra.mxu0 0.0
      %322 = vmatprep.subr.mxu0 0.0
      %323 = vmatpush1.msra.mxu0 0.0
      %324 = vmatprep.mubr.f32.mxu0 0.0
      %325 = vmatmul.mubr.f32.gmra.mrb[0].mxu0 %v243
      %v326 = vpop.f32.mrb[0].mxu0
      %v327 = vadd.f32 0.0, %v326
      %v328 = vpop.f32.mrb[0].mxu0
      %329 = vdwg.mxu0
      %v330 = vld [vmem:[#allocation2] sm:$0xff]
      %v331 = vld [vmem:[%s2] sm:$0x1]
      %v333 = vlaneseq
      %v334 = vshrl.u32 %v333, 7
      %v335 = vsub.s32 0, %v334
      %v336 = vrot.slane %v331, %v335
      %v338 = vadd.f32 %v330, %v336
      %v339 = vadd.f32 %v338, %v327
      %340 = vst [vmem:[#allocation4] sm:$0xff] %v339
    $region37: #{flora_linear.1} parent=1 // pred_fallthru
      _
    // Predicated region
    $region38: #{flora_linear.1} parent=1 // pred_check
      _
    $region39: #{flora_linear.1} parent=1 // pred_check_branch
      %342 = sbr.rel (0) target = $region41
    $region40: #{flora_linear.1} parent=1 // pred_region
      %s344 = ssub.s32 128, 128
      %345 = vsyncadd [#allocation5], %s344
      %s347 = sshll.u32 [#allocation4], 4
      %s348 = int_to_ptr.vmem [resolvable:$true] %s347
      %350 = dma.vmem_to_hbm [thread:$0]  %s348, 128, %s5, [#allocation5]
    $region41: #{flora_linear.1} parent=1 // pred_fallthru
      _
    // Predicated region
    $region42: #{flora_linear.1} parent=1 // pred_check
      _
    $region43: #{flora_linear.1} parent=1 // pred_check_branch
      %352 = sbr.rel (0) target = $region45
    $region44: #{flora_linear.1} parent=1 // pred_region
      %353 = dma.done [#allocation5], 128
    $region45: #{flora_linear.1} parent=1 // pred_fallthru
      _
    %354 = vsyncpa [#allocation5], 1

</llo_original>
